<compile_context>
chip_gen: v7x
topology: tpu7x:2x2x1
jax: 0.10.0
libtpu: 0.0.40
codegen_flags: <defaults>
</compile_context>

<pallas_src>
import math

import jax
import jax.numpy as jnp
from jax.experimental import pallas as pl
from jax.experimental.pallas import tpu as pltpu

_BN_EPS = 1e-5
_INV_SQRT2 = 0.7071067811865476
_SQRT_2_OVER_PI = 0.7978845608028654
_GELU_C = 0.044715
_VMEM_LIMIT = 48 * 1024 * 1024   # <= v7x 64 MiB physical; plenty on v5e/v6e


def _round_up(x: int, m: int) -> int:
    return (x + m - 1) // m * m


def _cdiv(a: int, b: int) -> int:
    return -(-a // b)


def _gelu(z):
    # tanh-approximation GELU: the tanh lands on the EUP slot so pass 2 stays
    # HBM-bound on v7x (exact erf expands to ~20 VALU ops/elem and flips the regime).
    return 0.5 * z * (1.0 + jnp.tanh(_SQRT_2_OVER_PI * (z + _GELU_C * z * z * z)))


# ---------------------------------------------------------------------------
# Pass 1 kernels: conv-as-matmul + per-channel batch-stat accumulation.
# Grid = (core, tile); stats blocks are per-core resident accumulators.
# ---------------------------------------------------------------------------
def _conv_stats_kernel(patches_ref, w_ref, sum_ref, sumsq_ref):
    # patches_ref: [TILE_M, K] bf16   w_ref: [K, Cp] bf16 (grid-invariant -> stays in VMEM)
    # sum_ref / sumsq_ref: [8, Cp] f32 per-core resident accumulators
    i = pl.program_id(1)
    y = jnp.dot(patches_ref[...], w_ref[...], preferred_element_type=jnp.float32)

    @pl.when(i == 0)
    def _init():
        sum_ref[...] = jnp.zeros_like(sum_ref)
        sumsq_ref[...] = jnp.zeros_like(sumsq_ref)

    # (1, Cp) row-sums broadcast across the 8 sublanes of the resident stat block.
    sum_ref[...] += jnp.sum(y, axis=0, keepdims=True)
    sumsq_ref[...] += jnp.sum(y * y, axis=0, keepdims=True)


def _conv_stats_store_kernel(patches_ref, w_ref, y_ref, sum_ref, sumsq_ref):
    # Same as above, but additionally stores the conv result as a bf16 intermediate
    # (stats are reduced from the f32 accumulator BEFORE the narrowing cast).
    i = pl.program_id(1)
    y = jnp.dot(patches_ref[...], w_ref[...], preferred_element_type=jnp.float32)

    @pl.when(i == 0)
    def _init():
        sum_ref[...] = jnp.zeros_like(sum_ref)
        sumsq_ref[...] = jnp.zeros_like(sumsq_ref)

    sum_ref[...] += jnp.sum(y, axis=0, keepdims=True)
    sumsq_ref[...] += jnp.sum(y * y, axis=0, keepdims=True)
    y_ref[...] = y.astype(y_ref.dtype)


# ---------------------------------------------------------------------------
# Pass 2 kernels: folded BN (one scale + one shift per channel) + GELU.
# ---------------------------------------------------------------------------
def _conv_bn_gelu_kernel(patches_ref, w_ref, scale_ref, shift_ref, o_ref):
    # Recompute path: redo the (MXU-slack-free) matmul, never touch a y intermediate.
    y = jnp.dot(patches_ref[...], w_ref[...], preferred_element_type=jnp.float32)
    z = y * scale_ref[...] + shift_ref[...]
    o_ref[...] = _gelu(z).astype(o_ref.dtype)


def _bn_gelu_kernel(y_ref, scale_ref, shift_ref, o_ref):
    # Intermediate path: read back the bf16 conv result.
    z = y_ref[...].astype(jnp.float32) * scale_ref[...] + shift_ref[...]
    o_ref[...] = _gelu(z).astype(o_ref.dtype)


@jax.jit
def down_conv(x_nchw, weight, bias, gamma, beta):
    """Forward pass of DownConv.

    x_nchw : [N, C_in, H, W]
    weight : [C_out, C_in, 3, 3]   (PyTorch conv weight layout)
    bias   : [C_out]               (mathematically folded out by train-mode BN)
    gamma  : [C_out]  (BatchNorm weight)
    beta   : [C_out]  (BatchNorm bias)
    returns: [N, C_out, H_out, W_out]  (NCHW, same as PyTorch)
    """
    N, C_in, H, W = x_nchw.shape
    C_out = weight.shape[0]
    kh = kw = 3
    stride = 2
    pad = 1
    H_out = (H + 2 * pad - kh) // stride + 1
    W_out = (W + 2 * pad - kw) // stride + 1

    M = N * H_out * W_out
    K = kh * kw * C_in
    Cp = _round_up(C_out, 128)                 # lane-dense output channels

    # Large tiles: ~2-4 MiB double-buffered, far under VMEM on every generation.
    TILE_M = 2048 if Cp <= 256 else 1024
    TILE_M = min(TILE_M, _round_up(M, 8))

    num_tiles = _cdiv(M, TILE_M)
    NUM_CORES = 2 if num_tiles >= 2 else 1     # v7x megacore sharding of pass 1
    tiles_per_core = _cdiv(num_tiles, NUM_CORES)
    M_pad = NUM_CORES * tiles_per_core * TILE_M
    total_tiles = M_pad // TILE_M

    # Conv bias is removed exactly by the BN mean subtraction (train mode); dropping it
    # also guarantees zero-padded patch rows produce y == 0 and do not perturb stats.
    del bias

    # ---- glue: NCHW -> NHWC, bf16 early, zero-pad, im2col ((kh,kw),C_in ordering) ----
    x = jnp.transpose(x_nchw, (0, 2, 3, 1)).astype(jnp.bfloat16)          # [N, H, W, C_in]
    x_pad = jnp.pad(x, ((0, 0), (pad, pad), (pad, pad), (0, 0)))
    slabs = []
    for di in range(kh):
        for dj in range(kw):
            slabs.append(
                x_pad[:, di:di + stride * (H_out - 1) + 1:stride,
                         dj:dj + stride * (W_out - 1) + 1:stride, :])     # [N, Ho, Wo, C_in]
    patches = jnp.stack(slabs, axis=3).reshape(M, K)                      # bf16 [M, K]
    if M_pad > M:
        patches = jnp.pad(patches, ((0, M_pad - M), (0, 0)))

    # weight [C_out, C_in, kh, kw] -> [K, C_out] -> zero-pad channels to Cp -> bf16
    w_mat = jnp.transpose(weight.astype(jnp.float32), (2, 3, 1, 0)).reshape(K, C_out)
    w_mat = jnp.pad(w_mat, ((0, 0), (0, Cp - C_out))).astype(jnp.bfloat16)

    gamma_p = jnp.pad(gamma.astype(jnp.float32), (0, Cp - C_out)).reshape(1, Cp)
    beta_p = jnp.pad(beta.astype(jnp.float32), (0, Cp - C_out)).reshape(1, Cp)

    # Recompute the conv in pass 2 when re-reading the bf16 patches (2*K bytes/row) is
    # cheaper than writing + re-reading a bf16 y intermediate (4*Cp bytes/row).
    recompute_conv = (2 * K) <= (4 * Cp)

    patches_spec1 = pl.BlockSpec((TILE_M, K), lambda c, i: (c * tiles_per_core + i, 0))
    weight_spec1 = pl.BlockSpec((K, Cp), lambda c, i: (0, 0))
    stats_spec = pl.BlockSpec((8, Cp), lambda c, i: (c, 0))
    stats_shape = jax.ShapeDtypeStruct((8 * NUM_CORES, Cp), jnp.float32)
    cparams1 = pltpu.CompilerParams(
        dimension_semantics=("parallel", "arbitrary"),   # cores parallel, tiles reduce
        vmem_limit_bytes=_VMEM_LIMIT,
    )

    # ---- pass 1: tiled conv matmul + per-channel sum / sumsq ----
    if recompute_conv:
        ch_sum8, ch_sumsq8 = pl.pallas_call(
            _conv_stats_kernel,
            grid=(NUM_CORES, tiles_per_core),
            in_specs=[patches_spec1, weight_spec1],
            out_specs=(stats_spec, stats_spec),
            out_shape=(stats_shape, stats_shape),
            compiler_params=cparams1,
        )(patches, w_mat)
        y_flat = None
    else:
        y_flat, ch_sum8, ch_sumsq8 = pl.pallas_call(
            _conv_stats_store_kernel,
            grid=(NUM_CORES, tiles_per_core),
            in_specs=[patches_spec1, weight_spec1],
            out_specs=(
                pl.BlockSpec((TILE_M, Cp), lambda c, i: (c * tiles_per_core + i, 0)),
                stats_spec,
                stats_spec,
            ),
            out_shape=(
                jax.ShapeDtypeStruct((M_pad, Cp), jnp.bfloat16),
                stats_shape,
                stats_shape,
            ),
            compiler_params=cparams1,
        )(patches, w_mat)

    # Every sublane of a core's stat block holds the same per-core partial sum;
    # take sublane 0 of each core block and reduce across cores.
    ch_sum = ch_sum8.reshape(NUM_CORES, 8, Cp)[:, 0, :].sum(axis=0, keepdims=True)
    ch_sumsq = ch_sumsq8.reshape(NUM_CORES, 8, Cp)[:, 0, :].sum(axis=0, keepdims=True)

    # ---- fold train-mode BN into one per-channel scale/shift (tiny, plain JAX) ----
    # TODO(synk): switch to shifted / true two-pass variance if |mean| >> std at scale.
    inv_m = 1.0 / float(M)            # divide by real M: padded rows contribute exact zeros
    mean = ch_sum * inv_m
    var = jnp.maximum(ch_sumsq * inv_m - mean * mean, 0.0)
    scale = gamma_p * jax.lax.rsqrt(var + _BN_EPS)
    shift = beta_p - mean * scale     # padded channels: gamma=0 -> scale=0, shift=0 -> output 0

    # ---- pass 2: (recomputed conv or bf16 y) + folded BN + GELU, parallel over tiles ----
    cparams2 = pltpu.CompilerParams(
        dimension_semantics=("parallel",),               # megacore-shards on v7x
        vmem_limit_bytes=_VMEM_LIMIT,
    )
    bcast_spec = pl.BlockSpec((1, Cp), lambda i: (0, 0))
    out_spec = pl.BlockSpec((TILE_M, Cp), lambda i: (i, 0))
    out_shape = jax.ShapeDtypeStruct((M_pad, Cp), jnp.float32)

    if recompute_conv:
        out_flat = pl.pallas_call(
            _conv_bn_gelu_kernel,
            grid=(total_tiles,),
            in_specs=[
                pl.BlockSpec((TILE_M, K), lambda i: (i, 0)),
                pl.BlockSpec((K, Cp), lambda i: (0, 0)),
                bcast_spec,
                bcast_spec,
            ],
            out_specs=out_spec,
            out_shape=out_shape,
            compiler_params=cparams2,
        )(patches, w_mat, scale, shift)
    else:
        out_flat = pl.pallas_call(
            _bn_gelu_kernel,
            grid=(total_tiles,),
            in_specs=[
                pl.BlockSpec((TILE_M, Cp), lambda i: (i, 0)),
                bcast_spec,
                bcast_spec,
            ],
            out_specs=out_spec,
            out_shape=out_shape,
            compiler_params=cparams2,
        )(y_flat, scale, shift)

    # ---- glue: slice off M/C padding, [M, C_out] -> NHWC -> NCHW ----
    out_nhwc = out_flat[:M, :C_out].reshape(N, H_out, W_out, C_out)
    return jnp.transpose(out_nhwc, (0, 3, 1, 2))


def _reference(x, weight, bias, gamma, beta):
    """Pure-JAX reference matching the PyTorch module (train-mode BN, exact erf GELU)."""
    y = jax.lax.conv_general_dilated(
        x.astype(jnp.float32), weight.astype(jnp.float32),
        window_strides=(2, 2), padding=((1, 1), (1, 1)),
        dimension_numbers=("NCHW", "OIHW", "NCHW"),
    ) + bias.reshape(1, -1, 1, 1)
    mean = jnp.mean(y, axis=(0, 2, 3), keepdims=True)
    var = jnp.mean(jnp.square(y - mean), axis=(0, 2, 3), keepdims=True)
    z = (y - mean) * jax.lax.rsqrt(var + _BN_EPS)
    z = z * gamma.reshape(1, -1, 1, 1) + beta.reshape(1, -1, 1, 1)
    return 0.5 * z * (1.0 + jax.lax.erf(z * _INV_SQRT2))


if __name__ == "__main__":
    key = jax.random.PRNGKey(0)
    k_x, k_w, k_b, k_g, k_bt = jax.random.split(key, 5)

    N, C_in, H, W = 2, 4, 16, 16
    C_out = 8

    x = jax.random.normal(k_x, (N, C_in, H, W), dtype=jnp.float32)

    # Deterministic parameter init (PyTorch-style U(-bound, bound) for conv)
    fan_in = C_in * 3 * 3
    bound = 1.0 / math.sqrt(fan_in)
    weight = jax.random.uniform(k_w, (C_out, C_in, 3, 3), minval=-bound, maxval=bound,
                                dtype=jnp.float32)
    bias = jax.random.uniform(k_b, (C_out,), minval=-bound, maxval=bound, dtype=jnp.float32)
    gamma = 1.0 + 0.1 * jax.random.normal(k_g, (C_out,), dtype=jnp.float32)
    beta = 0.1 * jax.random.normal(k_bt, (C_out,), dtype=jnp.float32)

    out = down_conv(x, weight, bias, gamma, beta)
    jax.block_until_ready(out)
    assert out.shape == (N, C_out, H // 2, W // 2), out.shape

    ref = _reference(x, weight, bias, gamma, beta)
    err = float(jnp.max(jnp.abs(out - ref)))
    # bf16 MXU operands (f32 accumulate) + tanh-GELU vs exact erf: << 5e-2.
    assert err < 5e-2, f"max abs error {err} too large"
    print("KERNEL_OK")
</pallas_src>

<mosaic_0001>
module attributes {stable_mosaic.version = 11 : i64} {
  func.func @_conv_stats_kernel(%arg0: i32, %arg1: i32, %arg2: memref<128x36xbf16, #tpu.memory_space<vmem>>, %arg3: memref<36x128xbf16, #tpu.memory_space<vmem>>, %arg4: memref<8x128xf32, #tpu.memory_space<vmem>>, %arg5: memref<8x128xf32, #tpu.memory_space<vmem>>) attributes {dimension_semantics = [#tpu.dimension_semantics<parallel>, #tpu.dimension_semantics<arbitrary>], iteration_bounds = array<i64: 1, 1>, scalar_prefetch = 0 : i64, scratch_operands = 0 : i64, tpu.core_type = #tpu.core_type<tc>, window_params = [{transform_indices = @transform_0, window_bounds = array<i64: 128, 36>}, {pipeline_mode = #tpu.pipeline_mode<synchronous>, transform_indices = @transform_1, window_bounds = array<i64: 36, 128>}, {transform_indices = @transform_2, window_bounds = array<i64: 8, 128>}, {transform_indices = @transform_3, window_bounds = array<i64: 8, 128>}]} {
    %c0 = arith.constant 0 : index
    %c0_0 = arith.constant 0 : index
    %0 = vector.load %arg2[%c0, %c0_0] : memref<128x36xbf16, #tpu.memory_space<vmem>>, vector<128x36xbf16>
    %c0_1 = arith.constant 0 : index
    %c0_2 = arith.constant 0 : index
    %1 = vector.load %arg3[%c0_1, %c0_2] : memref<36x128xbf16, #tpu.memory_space<vmem>>, vector<36x128xbf16>
    %cst = arith.constant dense<0.000000e+00> : vector<128x128xf32>
    %2 = tpu.matmul %0, %1, %cst {dimension_numbers = #tpu.dot_dimension_numbers<[1], [0], [0], [1], [0, 0, 1, 1], [], []>} : vector<128x36xbf16>, vector<36x128xbf16>, vector<128x128xf32> -> vector<128x128xf32>
    %c0_i32 = arith.constant 0 : i32
    %3 = arith.cmpi eq, %arg1, %c0_i32 : i32
    %4 = arith.extui %3 : i1 to i32
    %c0_i32_3 = arith.constant 0 : i32
    %5 = arith.cmpi ne, %4, %c0_i32_3 : i32
    scf.if %5 {
      %cst_14 = arith.constant 0.000000e+00 : f32
      %19 = vector.broadcast %cst_14 : f32 to vector<8x128xf32>
      %c0_15 = arith.constant 0 : index
      %c0_16 = arith.constant 0 : index
      %20 = vector.load %arg4[%c0_15, %c0_16] : memref<8x128xf32, #tpu.memory_space<vmem>>, vector<8x128xf32>
      tpu.vector_store %arg4[%c0_15, %c0_16], %19 {strides = array<i32>} : memref<8x128xf32, #tpu.memory_space<vmem>>, vector<8x128xf32>,
      %cst_17 = arith.constant 0.000000e+00 : f32
      %21 = vector.broadcast %cst_17 : f32 to vector<8x128xf32>
      %c0_18 = arith.constant 0 : index
      %c0_19 = arith.constant 0 : index
      %22 = vector.load %arg5[%c0_18, %c0_19] : memref<8x128xf32, #tpu.memory_space<vmem>>, vector<8x128xf32>
      tpu.vector_store %arg5[%c0_18, %c0_19], %21 {strides = array<i32>} : memref<8x128xf32, #tpu.memory_space<vmem>>, vector<8x128xf32>,
    } else {
    }
    %c0_4 = arith.constant 0 : index
    %c0_5 = arith.constant 0 : index
    %6 = vector.load %arg4[%c0_4, %c0_5] : memref<8x128xf32, #tpu.memory_space<vmem>>, vector<8x128xf32>
    %cst_6 = arith.constant dense<0.000000e+00> : vector<128xf32>
    %7 = vector.multi_reduction <add>, %2, %cst_6 [0] : vector<128x128xf32> to vector<128xf32>
    %8 = vector.shape_cast %7 : vector<128xf32> to vector<1x128xf32>
    %9 = vector.broadcast %8 : vector<1x128xf32> to vector<8x128xf32>
    %10 = arith.addf %6, %9 : vector<8x128xf32>
    %c0_7 = arith.constant 0 : index
    %c0_8 = arith.constant 0 : index
    %11 = vector.load %arg4[%c0_7, %c0_8] : memref<8x128xf32, #tpu.memory_space<vmem>>, vector<8x128xf32>
    tpu.vector_store %arg4[%c0_7, %c0_8], %10 {strides = array<i32>} : memref<8x128xf32, #tpu.memory_space<vmem>>, vector<8x128xf32>,
    %c0_9 = arith.constant 0 : index
    %c0_10 = arith.constant 0 : index
    %12 = vector.load %arg5[%c0_9, %c0_10] : memref<8x128xf32, #tpu.memory_space<vmem>>, vector<8x128xf32>
    %13 = arith.mulf %2, %2 : vector<128x128xf32>
    %cst_11 = arith.constant dense<0.000000e+00> : vector<128xf32>
    %14 = vector.multi_reduction <add>, %13, %cst_11 [0] : vector<128x128xf32> to vector<128xf32>
    %15 = vector.shape_cast %14 : vector<128xf32> to vector<1x128xf32>
    %16 = vector.broadcast %15 : vector<1x128xf32> to vector<8x128xf32>
    %17 = arith.addf %12, %16 : vector<8x128xf32>
    %c0_12 = arith.constant 0 : index
    %c0_13 = arith.constant 0 : index
    %18 = vector.load %arg5[%c0_12, %c0_13] : memref<8x128xf32, #tpu.memory_space<vmem>>, vector<8x128xf32>
    tpu.vector_store %arg5[%c0_12, %c0_13], %17 {strides = array<i32>} : memref<8x128xf32, #tpu.memory_space<vmem>>, vector<8x128xf32>,
    return
  }
  func.func @transform_0(%arg0: i32, %arg1: i32) -> (i32, i32) {
    %c1_i32 = arith.constant 1 : i32
    %0 = arith.muli %arg0, %c1_i32 : i32
    %1 = arith.addi %0, %arg1 : i32
    %c0_i32 = arith.constant 0 : i32
    %c0_i32_0 = arith.constant 0 : i32
    return %1, %c0_i32 : i32, i32
  }
  func.func @transform_1(%arg0: i32, %arg1: i32) -> (i32, i32) {
    %c0_i32 = arith.constant 0 : i32
    %c0_i32_0 = arith.constant 0 : i32
    %c0_i32_1 = arith.constant 0 : i32
    return %c0_i32, %c0_i32_0 : i32, i32
  }
  func.func @transform_2(%arg0: i32, %arg1: i32) -> (i32, i32) {
    %c0_i32 = arith.constant 0 : i32
    %c0_i32_0 = arith.constant 0 : i32
    return %arg0, %c0_i32 : i32, i32
  }
  func.func @transform_3(%arg0: i32, %arg1: i32) -> (i32, i32) {
    %c0_i32 = arith.constant 0 : i32
    %c0_i32_0 = arith.constant 0 : i32
    return %arg0, %c0_i32 : i32, i32
  }
}

module attributes {stable_mosaic.version = 11 : i64} {
  func.func @_conv_bn_gelu_kernel(%arg0: i32, %arg1: memref<128x36xbf16, #tpu.memory_space<vmem>>, %arg2: memref<36x128xbf16, #tpu.memory_space<vmem>>, %arg3: memref<1x128xf32, #tpu.memory_space<vmem>>, %arg4: memref<1x128xf32, #tpu.memory_space<vmem>>, %arg5: memref<128x128xf32, #tpu.memory_space<vmem>>) attributes {dimension_semantics = [#tpu.dimension_semantics<parallel>], iteration_bounds = array<i64: 1>, scalar_prefetch = 0 : i64, scratch_operands = 0 : i64, tpu.core_type = #tpu.core_type<tc>, window_params = [{transform_indices = @transform_0, window_bounds = array<i64: 128, 36>}, {pipeline_mode = #tpu.pipeline_mode<synchronous>, transform_indices = @transform_1, window_bounds = array<i64: 36, 128>}, {pipeline_mode = #tpu.pipeline_mode<synchronous>, transform_indices = @transform_2, window_bounds = array<i64: 1, 128>}, {pipeline_mode = #tpu.pipeline_mode<synchronous>, transform_indices = @transform_3, window_bounds = array<i64: 1, 128>}, {transform_indices = @transform_4, window_bounds = array<i64: 128, 128>}]} {
    %c0 = arith.constant 0 : index
    %c0_0 = arith.constant 0 : index
    %0 = vector.load %arg1[%c0, %c0_0] : memref<128x36xbf16, #tpu.memory_space<vmem>>, vector<128x36xbf16>
    %c0_1 = arith.constant 0 : index
    %c0_2 = arith.constant 0 : index
    %1 = vector.load %arg2[%c0_1, %c0_2] : memref<36x128xbf16, #tpu.memory_space<vmem>>, vector<36x128xbf16>
    %cst = arith.constant dense<0.000000e+00> : vector<128x128xf32>
    %2 = tpu.matmul %0, %1, %cst {dimension_numbers = #tpu.dot_dimension_numbers<[1], [0], [0], [1], [0, 0, 1, 1], [], []>} : vector<128x36xbf16>, vector<36x128xbf16>, vector<128x128xf32> -> vector<128x128xf32>
    %c0_3 = arith.constant 0 : index
    %c0_4 = arith.constant 0 : index
    %3 = vector.load %arg3[%c0_3, %c0_4] : memref<1x128xf32, #tpu.memory_space<vmem>>, vector<1x128xf32>
    %4 = vector.broadcast %3 : vector<1x128xf32> to vector<128x128xf32>
    %5 = arith.mulf %2, %4 : vector<128x128xf32>
    %c0_5 = arith.constant 0 : index
    %c0_6 = arith.constant 0 : index
    %6 = vector.load %arg4[%c0_5, %c0_6] : memref<1x128xf32, #tpu.memory_space<vmem>>, vector<1x128xf32>
    %7 = vector.broadcast %6 : vector<1x128xf32> to vector<128x128xf32>
    %8 = arith.addf %5, %7 : vector<128x128xf32>
    %cst_7 = arith.constant 5.000000e-01 : f32
    %9 = vector.broadcast %cst_7 : f32 to vector<128x128xf32>
    %10 = arith.mulf %9, %8 : vector<128x128xf32>
    %cst_8 = arith.constant 4.471500e-02 : f32
    %11 = vector.broadcast %cst_8 : f32 to vector<128x128xf32>
    %12 = arith.mulf %11, %8 : vector<128x128xf32>
    %13 = arith.mulf %12, %8 : vector<128x128xf32>
    %14 = arith.mulf %13, %8 : vector<128x128xf32>
    %15 = arith.addf %8, %14 : vector<128x128xf32>
    %cst_9 = arith.constant 0.797884583 : f32
    %16 = vector.broadcast %cst_9 : f32 to vector<128x128xf32>
    %17 = arith.mulf %16, %15 : vector<128x128xf32>
    %18 = math.tanh %17 : vector<128x128xf32>
    %cst_10 = arith.constant 1.000000e+00 : f32
    %19 = vector.broadcast %cst_10 : f32 to vector<128x128xf32>
    %20 = arith.addf %19, %18 : vector<128x128xf32>
    %21 = arith.mulf %10, %20 : vector<128x128xf32>
    %c0_11 = arith.constant 0 : index
    %c0_12 = arith.constant 0 : index
    %22 = vector.load %arg5[%c0_11, %c0_12] : memref<128x128xf32, #tpu.memory_space<vmem>>, vector<128x128xf32>
    tpu.vector_store %arg5[%c0_11, %c0_12], %21 {strides = array<i32>} : memref<128x128xf32, #tpu.memory_space<vmem>>, vector<128x128xf32>,
    return
  }
  func.func @transform_0(%arg0: i32) -> (i32, i32) {
    %c0_i32 = arith.constant 0 : i32
    %c0_i32_0 = arith.constant 0 : i32
    return %arg0, %c0_i32 : i32, i32
  }
  func.func @transform_1(%arg0: i32) -> (i32, i32) {
    %c0_i32 = arith.constant 0 : i32
    %c0_i32_0 = arith.constant 0 : i32
    %c0_i32_1 = arith.constant 0 : i32
    return %c0_i32, %c0_i32_0 : i32, i32
  }
  func.func @transform_2(%arg0: i32) -> (i32, i32) {
    %c0_i32 = arith.constant 0 : i32
    %c0_i32_0 = arith.constant 0 : i32
    %c0_i32_1 = arith.constant 0 : i32
    return %c0_i32, %c0_i32_0 : i32, i32
  }
  func.func @transform_3(%arg0: i32) -> (i32, i32) {
    %c0_i32 = arith.constant 0 : i32
    %c0_i32_0 = arith.constant 0 : i32
    %c0_i32_1 = arith.constant 0 : i32
    return %c0_i32, %c0_i32_0 : i32, i32
  }
  func.func @transform_4(%arg0: i32) -> (i32, i32) {
    %c0_i32 = arith.constant 0 : i32
    %c0_i32_0 = arith.constant 0 : i32
    return %arg0, %c0_i32 : i32, i32
  }
}

</mosaic_0001>

<llo_original>
// kernel: down_conv.2
$region0: #{down_conv.2}
  #allocation0 [shape = 'u32[]', space=smem, size = 0x4, offset = 0x4, fixed_abs, tag = 'smem constant byte address 0x4 - core index']
  #allocation1 [shape = 'u32[144,128]{1,0:T(1,128)}', space=vmem, size = 0x12000, scoped, tag = 'internal scratch']
  %s0 = inlined_call_operand.vmem [shape: bf16[128,36], index: 0, kind: input, shape index: {}]
  %s1 = inlined_call_operand.vmem [shape: bf16[36,128], index: 1, kind: input, shape index: {}]
  %s2 = inlined_call_operand.vmem [shape: f32[8,128], index: 2, kind: output, shape index: {0}]
  %s3 = inlined_call_operand.vmem [shape: f32[8,128], index: 3, kind: output, shape index: {1}]
  %4 = xla_tuple %s2, %s3
  %s5 = sld [smem:[#allocation0]]
  $region30: #{down_conv.2} parent=0
    _
  %s7 = ssub.s32 1, %s5
  %s8 = scalar_select 0, %s7, %s5
  // Predicated region
  $region2: #{down_conv.2} parent=0 // pred_check
    _
  $region3: #{down_conv.2} parent=0 // pred_check_branch
    %10 = sbr.rel (0) target = $region5
  $region4: #{down_conv.2} parent=0 // pred_region
    %s11 = sadd.s32 0, 0
    %s12 = smul.u32 16, %s11
    %p13 = scmp.lt.s32.totalorder %s12, 15
    %s14 = scalar_select %p13, %s12, 15
    %s15 = smul.addr %s14, 4
    %s16 = scalar_lea.vmem %s0, %s15
    %s17 = sadd.s32 0, 0
    %s18 = smul.u32 16, %s17
  $region5: #{down_conv.2} parent=0 // pred_fallthru
    _
  // Predicated region
  $region6: #{down_conv.2} parent=0 // pred_check
    _
  $region7: #{down_conv.2} parent=0 // pred_check_branch
    %20 = sbr.rel (0) target = $region9
  $region8: #{down_conv.2} parent=0 // pred_region
    _
  $region9: #{down_conv.2} parent=0 // pred_fallthru
    _
  %s21 = sadd.s32 0, 0
  %s22 = smul.u32 16, %s21
  %p23 = scmp.lt.s32.totalorder %s22, 15
  %s24 = scalar_select %p23, %s22, 15
  %s25 = smul.addr %s24, 4
  %s26 = scalar_lea.vmem %s0, %s25
  %s27 = sadd.s32 0, 0
  %s28 = smul.u32 16, %s27
  %p29 = scmp.lt.s32.totalorder %s28, 15
  %s30 = scalar_select %p29, %s28, 15
  %s31 = smul.addr %s30, 4
  %s32 = scalar_lea.vmem %s0, %s31
  %s33 = sadd.s32 0, 0
  %s34 = smul.u32 16, %s33
  %v36 = vld [vmem:[%s32] sm:$0xf]
  %v37 = vld [vmem:[%s32 + $0x4] sm:$0xf]
  %v38 = vld [vmem:[%s32 + $0x8] sm:$0xf]
  %v39 = vld [vmem:[%s32 + $0xc] sm:$0xf]
  %v40 = vld [vmem:[%s32 + $0x10] sm:$0xf]
  %v41 = vld [vmem:[%s32 + $0x14] sm:$0xf]
  %v42 = vld [vmem:[%s32 + $0x18] sm:$0xf]
  %v43 = vld [vmem:[%s32 + $0x1c] sm:$0xf]
  %v44 = vld [vmem:[%s32 + $0x20] sm:$0xf]
  %v45 = vld [vmem:[%s32 + $0x24] sm:$0xf]
  %v46 = vld [vmem:[%s32 + $0x28] sm:$0xf]
  %v47 = vld [vmem:[%s32 + $0x2c] sm:$0xf]
  %v48 = vld [vmem:[%s32 + $0x30] sm:$0xf]
  %v49 = vld [vmem:[%s32 + $0x34] sm:$0xf]
  %v50 = vld [vmem:[%s32 + $0x38] sm:$0xf]
  %v51 = vld [vmem:[%s32 + $0x3c] sm:$0xf]
  %v52 = vld [vmem:[%s1] sm:$0xf]
  %v53 = vld [vmem:[%s1 + $0x4] sm:$0xf]
  %v54 = vld [vmem:[%s1 + $0x8] sm:$0xf]
  %v55 = vld [vmem:[%s1 + $0xc] sm:$0xf]
  %v56 = vld [vmem:[%s1 + $0x10] sm:$0x3]
  %v73 = vunpack.c.l.b16 %v36
  %v74 = vunpack.c.l.b16 %v37
  %v75 = vunpack.c.l.b16 %v38
  %v76 = vunpack.c.l.b16 %v39
  %v77 = vunpack.c.l.b16 %v40
  %v78 = vunpack.c.l.b16 %v41
  %v79 = vunpack.c.l.b16 %v42
  %v80 = vunpack.c.l.b16 %v43
  %v81 = vunpack.c.l.b16 %v44
  %v82 = vunpack.c.l.b16 %v45
  %v83 = vunpack.c.l.b16 %v46
  %v84 = vunpack.c.l.b16 %v47
  %v85 = vunpack.c.l.b16 %v48
  %v86 = vunpack.c.l.b16 %v49
  %v87 = vunpack.c.l.b16 %v50
  %v88 = vunpack.c.l.b16 %v51
  %v89 = vpack.c.b16 %v74, %v73
  %v90 = vpack.c.b16 %v76, %v75
  %v91 = vpack.c.b16 %v78, %v77
  %v92 = vpack.c.b16 %v80, %v79
  %v93 = vpack.c.b16 %v82, %v81
  %v94 = vpack.c.b16 %v84, %v83
  %v95 = vpack.c.b16 %v86, %v85
  %v96 = vpack.c.b16 %v88, %v87
  %v102 = vunpack.c.l.b16 %v52
  %v103 = vunpack.c.l.b16 %v53
  %v104 = vunpack.c.l.b16 %v54
  %v105 = vunpack.c.l.b16 %v55
  %v106 = vunpack.c.l.b16 %v56
  %v107 = vpack.c.b16 %v103, %v102
  %v108 = vpack.c.b16 %v105, %v104
  %v109 = vpack.c.b16 %v106, %v106
  %vm112 = vcmask 293888
  %v114 = vsel %vm112, %v89, 0
  %v117 = vsel %vm112, %v90, 0
  %v120 = vsel %vm112, %v91, 0
  %v123 = vsel %vm112, %v92, 0
  %v126 = vsel %vm112, %v93, 0
  %v129 = vsel %vm112, %v94, 0
  %v132 = vsel %vm112, %v95, 0
  %v135 = vsel %vm112, %v96, 0
  %vm137 = vcmask 1041408
  %v139 = vsel %vm137, %v109, 0
  %141 = vmatprep.subr.bf16.mxu0 0
  %142 = vmatpush1.bf16.msra.mxu0 %v107
  %143 = vmatprep.subr.bf16.mxu0 0
  %144 = vmatpush1.bf16.msra.mxu0 %v108
  %145 = vmatprep.subr.bf16.mxu0 0
  %146 = vmatpush1.bf16.msra.mxu0 %v139
  %147 = vmatprep.subr.bf16.mxu0 0
  %148 = vmatpush1.bf16.msra.mxu0 0
  %149 = vmatprep.subr.bf16.mxu0 0
  %150 = vmatpush1.bf16.msra.mxu0 0
  %151 = vmatprep.subr.bf16.mxu0 0
  %152 = vmatpush1.bf16.msra.mxu0 0
  %153 = vmatprep.subr.bf16.mxu0 0
  %154 = vmatpush1.bf16.msra.mxu0 0
  %155 = vmatprep.subr.bf16.mxu0 0
  %156 = vmatpush1.bf16.msra.mxu0 0
  %157 = vmatprep.subr.bf16.mxu0 0
  %158 = vmatpush1.bf16.msra.mxu0 0
  %159 = vmatprep.subr.bf16.mxu0 0
  %160 = vmatpush1.bf16.msra.mxu0 0
  %161 = vmatprep.subr.bf16.mxu0 0
  %162 = vmatpush1.bf16.msra.mxu0 0
  %163 = vmatprep.subr.bf16.mxu0 0
  %164 = vmatpush1.bf16.msra.mxu0 0
  %165 = vmatprep.subr.bf16.mxu0 0
  %166 = vmatpush1.bf16.msra.mxu0 0
  %167 = vmatprep.subr.bf16.mxu0 0
  %168 = vmatpush1.bf16.msra.mxu0 0
  %169 = vmatprep.subr.bf16.mxu0 0
  %170 = vmatpush1.bf16.msra.mxu0 0
  %171 = vmatprep.subr.bf16.mxu0 0
  %172 = vmatpush1.bf16.msra.mxu0 0
  %173 = vmatprep.mubr.bf16.mxu0 0
  %174 = vmatmul.mubr.bf16.gmra.mrb[0].mxu0 %v114
  %v175 = vpop.f32.mrb[0].mxu0
  %v176 = vadd.f32 0.0, %v175
  %v177 = vpop.f32.mrb[0].mxu0
  %v178 = vpop.f32.mrb[0].mxu0
  %v179 = vadd.f32 0.0, %v178
  %v180 = vpop.f32.mrb[0].mxu0
  %181 = vmatprep.mubr.bf16.mxu0 0
  %182 = vmatmul.mubr.bf16.gmra.mrb[0].mxu0 %v117
  %v183 = vpop.f32.mrb[0].mxu0
  %v184 = vadd.f32 0.0, %v183
  %v185 = vpop.f32.mrb[0].mxu0
  %v186 = vpop.f32.mrb[0].mxu0
  %v187 = vadd.f32 0.0, %v186
  %v188 = vpop.f32.mrb[0].mxu0
  %189 = vmatprep.mubr.bf16.mxu0 0
  %190 = vmatmul.mubr.bf16.gmra.mrb[0].mxu0 %v120
  %v191 = vpop.f32.mrb[0].mxu0
  %v192 = vadd.f32 0.0, %v191
  %v193 = vpop.f32.mrb[0].mxu0
  %v194 = vpop.f32.mrb[0].mxu0
  %v195 = vadd.f32 0.0, %v194
  %v196 = vpop.f32.mrb[0].mxu0
  %197 = vmatprep.mubr.bf16.mxu0 0
  %198 = vmatmul.mubr.bf16.gmra.mrb[0].mxu0 %v123
  %v199 = vpop.f32.mrb[0].mxu0
  %v200 = vadd.f32 0.0, %v199
  %v201 = vpop.f32.mrb[0].mxu0
  %v202 = vpop.f32.mrb[0].mxu0
  %v203 = vadd.f32 0.0, %v202
  %v204 = vpop.f32.mrb[0].mxu0
  %205 = vmatprep.mubr.bf16.mxu0 0
  %206 = vmatmul.mubr.bf16.gmra.mrb[0].mxu0 %v126
  %v207 = vpop.f32.mrb[0].mxu0
  %v208 = vadd.f32 0.0, %v207
  %v209 = vpop.f32.mrb[0].mxu0
  %v210 = vpop.f32.mrb[0].mxu0
  %v211 = vadd.f32 0.0, %v210
  %v212 = vpop.f32.mrb[0].mxu0
  %213 = vmatprep.mubr.bf16.mxu0 0
  %214 = vmatmul.mubr.bf16.gmra.mrb[0].mxu0 %v129
  %v215 = vpop.f32.mrb[0].mxu0
  %v216 = vadd.f32 0.0, %v215
  %v217 = vpop.f32.mrb[0].mxu0
  %v218 = vpop.f32.mrb[0].mxu0
  %v219 = vadd.f32 0.0, %v218
  %v220 = vpop.f32.mrb[0].mxu0
  %221 = vmatprep.mubr.bf16.mxu0 0
  %222 = vmatmul.mubr.bf16.gmra.mrb[0].mxu0 %v132
  %v223 = vpop.f32.mrb[0].mxu0
  %v224 = vadd.f32 0.0, %v223
  %v225 = vpop.f32.mrb[0].mxu0
  %v226 = vpop.f32.mrb[0].mxu0
  %v227 = vadd.f32 0.0, %v226
  %v228 = vpop.f32.mrb[0].mxu0
  %229 = vmatprep.mubr.bf16.mxu0 0
  %230 = vmatmul.mubr.bf16.gmra.mrb[0].mxu0 %v135
  %v231 = vpop.f32.mrb[0].mxu0
  %v232 = vadd.f32 0.0, %v231
  %v233 = vpop.f32.mrb[0].mxu0
  %v234 = vpop.f32.mrb[0].mxu0
  %v235 = vadd.f32 0.0, %v234
  %v236 = vpop.f32.mrb[0].mxu0
  %237 = vdwg.mxu0
  %p238 = scmp.eq.s32.totalorder 0, 0
  // Predicated region
  $region10: #{down_conv.2} parent=0 // pred_check
    %p239 = pneg %p238
  $region11: #{down_conv.2} parent=0 // pred_check_branch
    %241 = sbr.rel (%p239) target = $region13
  $region12: #{down_conv.2} parent=0 // pred_region
    %242 = vst [vmem:[%s2] sm:$0xff] 0.0
    %243 = vst [vmem:[%s3] sm:$0xff] 0.0
  $region13: #{down_conv.2} parent=0 // pred_fallthru
    _
  %v244 = vld [vmem:[%s2] sm:$0xff]
  %v245 = vadd.f32 %v176, %v179
  %v246 = vadd.f32 %v245, %v184
  %v247 = vadd.f32 %v246, %v187
  %v248 = vadd.f32 %v247, %v192
  %v249 = vadd.f32 %v248, %v195
  %v250 = vadd.f32 %v249, %v200
  %v251 = vadd.f32 %v250, %v203
  %v252 = vadd.f32 %v251, %v208
  %v253 = vadd.f32 %v252, %v211
  %v254 = vadd.f32 %v253, %v216
  %v255 = vadd.f32 %v254, %v219
  %v256 = vadd.f32 %v255, %v224
  %v257 = vadd.f32 %v256, %v227
  %v258 = vadd.f32 %v257, %v232
  %v259 = vadd.f32 %v258, %v235
  %v260 = vrot.slane %v259, 4
  %v261 = vadd.f32 %v259, %v260
  %v262 = vrot.slane %v261, 2
  %v263 = vadd.f32 %v261, %v262
  %v264 = vrot.slane %v263, 1
  %v265 = vadd.f32 %v263, %v264
  %v266 = vadd.f32 %v244, %v265
  %267 = vst [vmem:[%s2] sm:$0xff] %v266
  %v268 = vld [vmem:[%s3] sm:$0xff]
  %v269 = vmul.f32 %v176, %v176
  %v270 = vmul.f32 %v179, %v179
  %v271 = vmul.f32 %v184, %v184
  %v272 = vmul.f32 %v187, %v187
  %v273 = vmul.f32 %v192, %v192
  %v274 = vmul.f32 %v195, %v195
  %v275 = vmul.f32 %v200, %v200
  %v276 = vmul.f32 %v203, %v203
  %v277 = vmul.f32 %v208, %v208
  %v278 = vmul.f32 %v211, %v211
  %v279 = vmul.f32 %v216, %v216
  %v280 = vmul.f32 %v219, %v219
  %v281 = vmul.f32 %v224, %v224
  %v282 = vmul.f32 %v227, %v227
  %v283 = vmul.f32 %v232, %v232
  %v284 = vmul.f32 %v235, %v235
  %v285 = vadd.f32 %v269, %v270
  %v286 = vadd.f32 %v285, %v271
  %v287 = vadd.f32 %v286, %v272
  %v288 = vadd.f32 %v287, %v273
  %v289 = vadd.f32 %v288, %v274
  %v290 = vadd.f32 %v289, %v275
  %v291 = vadd.f32 %v290, %v276
  %v292 = vadd.f32 %v291, %v277
  %v293 = vadd.f32 %v292, %v278
  %v294 = vadd.f32 %v293, %v279
  %v295 = vadd.f32 %v294, %v280
  %v296 = vadd.f32 %v295, %v281
  %v297 = vadd.f32 %v296, %v282
  %v298 = vadd.f32 %v297, %v283
  %v299 = vadd.f32 %v298, %v284
  %v300 = vrot.slane %v299, 4
  %v301 = vadd.f32 %v299, %v300
  %v302 = vrot.slane %v301, 2
  %v303 = vadd.f32 %v301, %v302
  %v304 = vrot.slane %v303, 1
  %v305 = vadd.f32 %v303, %v304
  %v306 = vadd.f32 %v268, %v305
  %307 = vst [vmem:[%s3] sm:$0xff] %v306
  // Predicated region
  $region14: #{down_conv.2} parent=0 // pred_check
    _
  $region15: #{down_conv.2} parent=0 // pred_check_branch
    %309 = sbr.rel (0) target = $region17
  $region16: #{down_conv.2} parent=0 // pred_region
    _
  $region17: #{down_conv.2} parent=0 // pred_fallthru
    _
  // Predicated region
  $region18: #{down_conv.2} parent=0 // pred_check
    _
  $region19: #{down_conv.2} parent=0 // pred_check_branch
    %311 = sbr.rel (0) target = $region21
  $region20: #{down_conv.2} parent=0 // pred_region
    _
  $region21: #{down_conv.2} parent=0 // pred_fallthru
    _
  // Predicated region
  $region22: #{down_conv.2} parent=0 // pred_check
    _
  $region23: #{down_conv.2} parent=0 // pred_check_branch
    %313 = sbr.rel (0) target = $region25
  $region24: #{down_conv.2} parent=0 // pred_region
    _
  $region25: #{down_conv.2} parent=0 // pred_fallthru
    _
  // Predicated region
  $region26: #{down_conv.2} parent=0 // pred_check
    _
  $region27: #{down_conv.2} parent=0 // pred_check_branch
    %315 = sbr.rel (0) target = $region29
  $region28: #{down_conv.2} parent=0 // pred_region
    _
  $region29: #{down_conv.2} parent=0 // pred_fallthru
    _

// kernel: down_conv.3
$region0: #{down_conv.3}
  #allocation0 [shape = 'u32[]', space=smem, size = 0x4, offset = 0x4, fixed_abs, tag = 'smem constant byte address 0x4 - core index']
  #allocation1 [shape = 'u32[144,128]{1,0:T(1,128)}', space=vmem, size = 0x12000, scoped, tag = 'internal scratch']
  %s0 = inlined_call_operand.vmem [shape: bf16[128,36], index: 0, kind: input, shape index: {}]
  %s1 = inlined_call_operand.vmem [shape: bf16[36,128], index: 1, kind: input, shape index: {}]
  %s2 = inlined_call_operand.vmem [shape: f32[1,128], index: 2, kind: input, shape index: {}]
  %s3 = inlined_call_operand.vmem [shape: f32[1,128], index: 3, kind: input, shape index: {}]
  %s4 = inlined_call_operand.vmem [shape: f32[128,128], index: 4, kind: output, shape index: {}]
  %s5 = sld [smem:[#allocation0]]
  $region26: #{down_conv.3} parent=0
    _
  %s7 = ssub.s32 1, %s5
  %s8 = scalar_select 0, %s7, %s5
  // Predicated region
  $region2: #{down_conv.3} parent=0 // pred_check
    _
  $region3: #{down_conv.3} parent=0 // pred_check_branch
    %10 = sbr.rel (0) target = $region5
  $region4: #{down_conv.3} parent=0 // pred_region
    _
  $region5: #{down_conv.3} parent=0 // pred_fallthru
    _
  // Predicated region
  $region6: #{down_conv.3} parent=0 // pred_check
    _
  $region7: #{down_conv.3} parent=0 // pred_check_branch
    %12 = sbr.rel (0) target = $region9
  $region8: #{down_conv.3} parent=0 // pred_region
    _
  $region9: #{down_conv.3} parent=0 // pred_fallthru
    _
  // Predicated region
  $region10: #{down_conv.3} parent=0 // pred_check
    _
  $region11: #{down_conv.3} parent=0 // pred_check_branch
    %14 = sbr.rel (0) target = $region13
  $region12: #{down_conv.3} parent=0 // pred_region
    _
  $region13: #{down_conv.3} parent=0 // pred_fallthru
    _
  // Predicated region
  $region14: #{down_conv.3} parent=0 // pred_check
    _
  $region15: #{down_conv.3} parent=0 // pred_check_branch
    %16 = sbr.rel (0) target = $region17
  $region16: #{down_conv.3} parent=0 // pred_region
    _
  $region17: #{down_conv.3} parent=0 // pred_fallthru
    _
  %v18 = vld [vmem:[%s0] sm:$0xf]
  %v19 = vld [vmem:[%s0 + $0x4] sm:$0xf]
  %v20 = vld [vmem:[%s0 + $0x8] sm:$0xf]
  %v21 = vld [vmem:[%s0 + $0xc] sm:$0xf]
  %v22 = vld [vmem:[%s0 + $0x10] sm:$0xf]
  %v23 = vld [vmem:[%s0 + $0x14] sm:$0xf]
  %v24 = vld [vmem:[%s0 + $0x18] sm:$0xf]
  %v25 = vld [vmem:[%s0 + $0x1c] sm:$0xf]
  %v26 = vld [vmem:[%s0 + $0x20] sm:$0xf]
  %v27 = vld [vmem:[%s0 + $0x24] sm:$0xf]
  %v28 = vld [vmem:[%s0 + $0x28] sm:$0xf]
  %v29 = vld [vmem:[%s0 + $0x2c] sm:$0xf]
  %v30 = vld [vmem:[%s0 + $0x30] sm:$0xf]
  %v31 = vld [vmem:[%s0 + $0x34] sm:$0xf]
  %v32 = vld [vmem:[%s0 + $0x38] sm:$0xf]
  %v33 = vld [vmem:[%s0 + $0x3c] sm:$0xf]
  %v34 = vld [vmem:[%s1] sm:$0xf]
  %v35 = vld [vmem:[%s1 + $0x4] sm:$0xf]
  %v36 = vld [vmem:[%s1 + $0x8] sm:$0xf]
  %v37 = vld [vmem:[%s1 + $0xc] sm:$0xf]
  %v38 = vld [vmem:[%s1 + $0x10] sm:$0x3]
  %v55 = vunpack.c.l.b16 %v18
  %v56 = vunpack.c.l.b16 %v19
  %v57 = vunpack.c.l.b16 %v20
  %v58 = vunpack.c.l.b16 %v21
  %v59 = vunpack.c.l.b16 %v22
  %v60 = vunpack.c.l.b16 %v23
  %v61 = vunpack.c.l.b16 %v24
  %v62 = vunpack.c.l.b16 %v25
  %v63 = vunpack.c.l.b16 %v26
  %v64 = vunpack.c.l.b16 %v27
  %v65 = vunpack.c.l.b16 %v28
  %v66 = vunpack.c.l.b16 %v29
  %v67 = vunpack.c.l.b16 %v30
  %v68 = vunpack.c.l.b16 %v31
  %v69 = vunpack.c.l.b16 %v32
  %v70 = vunpack.c.l.b16 %v33
  %v71 = vpack.c.b16 %v56, %v55
  %v72 = vpack.c.b16 %v58, %v57
  %v73 = vpack.c.b16 %v60, %v59
  %v74 = vpack.c.b16 %v62, %v61
  %v75 = vpack.c.b16 %v64, %v63
  %v76 = vpack.c.b16 %v66, %v65
  %v77 = vpack.c.b16 %v68, %v67
  %v78 = vpack.c.b16 %v70, %v69
  %v84 = vunpack.c.l.b16 %v34
  %v85 = vunpack.c.l.b16 %v35
  %v86 = vunpack.c.l.b16 %v36
  %v87 = vunpack.c.l.b16 %v37
  %v88 = vunpack.c.l.b16 %v38
  %v89 = vpack.c.b16 %v85, %v84
  %v90 = vpack.c.b16 %v87, %v86
  %v91 = vpack.c.b16 %v88, %v88
  %vm94 = vcmask 293888
  %v96 = vsel %vm94, %v71, 0
  %v99 = vsel %vm94, %v72, 0
  %v102 = vsel %vm94, %v73, 0
  %v105 = vsel %vm94, %v74, 0
  %v108 = vsel %vm94, %v75, 0
  %v111 = vsel %vm94, %v76, 0
  %v114 = vsel %vm94, %v77, 0
  %v117 = vsel %vm94, %v78, 0
  %vm119 = vcmask 1041408
  %v121 = vsel %vm119, %v91, 0
  %123 = vmatprep.subr.bf16.mxu0 0
  %124 = vmatpush1.bf16.msra.mxu0 %v89
  %125 = vmatprep.subr.bf16.mxu0 0
  %126 = vmatpush1.bf16.msra.mxu0 %v90
  %127 = vmatprep.subr.bf16.mxu0 0
  %128 = vmatpush1.bf16.msra.mxu0 %v121
  %129 = vmatprep.subr.bf16.mxu0 0
  %130 = vmatpush1.bf16.msra.mxu0 0
  %131 = vmatprep.subr.bf16.mxu0 0
  %132 = vmatpush1.bf16.msra.mxu0 0
  %133 = vmatprep.subr.bf16.mxu0 0
  %134 = vmatpush1.bf16.msra.mxu0 0
  %135 = vmatprep.subr.bf16.mxu0 0
  %136 = vmatpush1.bf16.msra.mxu0 0
  %137 = vmatprep.subr.bf16.mxu0 0
  %138 = vmatpush1.bf16.msra.mxu0 0
  %139 = vmatprep.subr.bf16.mxu0 0
  %140 = vmatpush1.bf16.msra.mxu0 0
  %141 = vmatprep.subr.bf16.mxu0 0
  %142 = vmatpush1.bf16.msra.mxu0 0
  %143 = vmatprep.subr.bf16.mxu0 0
  %144 = vmatpush1.bf16.msra.mxu0 0
  %145 = vmatprep.subr.bf16.mxu0 0
  %146 = vmatpush1.bf16.msra.mxu0 0
  %147 = vmatprep.subr.bf16.mxu0 0
  %148 = vmatpush1.bf16.msra.mxu0 0
  %149 = vmatprep.subr.bf16.mxu0 0
  %150 = vmatpush1.bf16.msra.mxu0 0
  %151 = vmatprep.subr.bf16.mxu0 0
  %152 = vmatpush1.bf16.msra.mxu0 0
  %153 = vmatprep.subr.bf16.mxu0 0
  %154 = vmatpush1.bf16.msra.mxu0 0
  %155 = vmatprep.mubr.bf16.mxu0 0
  %156 = vmatmul.mubr.bf16.gmra.mrb[0].mxu0 %v96
  %v157 = vpop.f32.mrb[0].mxu0
  %v158 = vadd.f32 0.0, %v157
  %v159 = vpop.f32.mrb[0].mxu0
  %v160 = vpop.f32.mrb[0].mxu0
  %v161 = vadd.f32 0.0, %v160
  %v162 = vpop.f32.mrb[0].mxu0
  %163 = vmatprep.mubr.bf16.mxu0 0
  %164 = vmatmul.mubr.bf16.gmra.mrb[0].mxu0 %v99
  %v165 = vpop.f32.mrb[0].mxu0
  %v166 = vadd.f32 0.0, %v165
  %v167 = vpop.f32.mrb[0].mxu0
  %v168 = vpop.f32.mrb[0].mxu0
  %v169 = vadd.f32 0.0, %v168
  %v170 = vpop.f32.mrb[0].mxu0
  %171 = vmatprep.mubr.bf16.mxu0 0
  %172 = vmatmul.mubr.bf16.gmra.mrb[0].mxu0 %v102
  %v173 = vpop.f32.mrb[0].mxu0
  %v174 = vadd.f32 0.0, %v173
  %v175 = vpop.f32.mrb[0].mxu0
  %v176 = vpop.f32.mrb[0].mxu0
  %v177 = vadd.f32 0.0, %v176
  %v178 = vpop.f32.mrb[0].mxu0
  %179 = vmatprep.mubr.bf16.mxu0 0
  %180 = vmatmul.mubr.bf16.gmra.mrb[0].mxu0 %v105
  %v181 = vpop.f32.mrb[0].mxu0
  %v182 = vadd.f32 0.0, %v181
  %v183 = vpop.f32.mrb[0].mxu0
  %v184 = vpop.f32.mrb[0].mxu0
  %v185 = vadd.f32 0.0, %v184
  %v186 = vpop.f32.mrb[0].mxu0
  %187 = vmatprep.mubr.bf16.mxu0 0
  %188 = vmatmul.mubr.bf16.gmra.mrb[0].mxu0 %v108
  %v189 = vpop.f32.mrb[0].mxu0
  %v190 = vadd.f32 0.0, %v189
  %v191 = vpop.f32.mrb[0].mxu0
  %v192 = vpop.f32.mrb[0].mxu0
  %v193 = vadd.f32 0.0, %v192
  %v194 = vpop.f32.mrb[0].mxu0
  %195 = vmatprep.mubr.bf16.mxu0 0
  %196 = vmatmul.mubr.bf16.gmra.mrb[0].mxu0 %v111
  %v197 = vpop.f32.mrb[0].mxu0
  %v198 = vadd.f32 0.0, %v197
  %v199 = vpop.f32.mrb[0].mxu0
  %v200 = vpop.f32.mrb[0].mxu0
  %v201 = vadd.f32 0.0, %v200
  %v202 = vpop.f32.mrb[0].mxu0
  %203 = vmatprep.mubr.bf16.mxu0 0
  %204 = vmatmul.mubr.bf16.gmra.mrb[0].mxu0 %v114
  %v205 = vpop.f32.mrb[0].mxu0
  %v206 = vadd.f32 0.0, %v205
  %v207 = vpop.f32.mrb[0].mxu0
  %v208 = vpop.f32.mrb[0].mxu0
  %v209 = vadd.f32 0.0, %v208
  %v210 = vpop.f32.mrb[0].mxu0
  %211 = vmatprep.mubr.bf16.mxu0 0
  %212 = vmatmul.mubr.bf16.gmra.mrb[0].mxu0 %v117
  %v213 = vpop.f32.mrb[0].mxu0
  %v214 = vadd.f32 0.0, %v213
  %v215 = vpop.f32.mrb[0].mxu0
  %v216 = vpop.f32.mrb[0].mxu0
  %v217 = vadd.f32 0.0, %v216
  %v218 = vpop.f32.mrb[0].mxu0
  %219 = vdwg.mxu0
  %v220 = vld [vmem:[%s2] sm:$0x1]
  %v222 = vlaneseq
  %v223 = vshrl.u32 %v222, 7
  %v224 = vsub.s32 0, %v223
  %v225 = vrot.slane %v220, %v224
  %v227 = vmul.f32 %v158, %v225
  %v228 = vmul.f32 %v161, %v225
  %v229 = vmul.f32 %v166, %v225
  %v230 = vmul.f32 %v169, %v225
  %v231 = vmul.f32 %v174, %v225
  %v232 = vmul.f32 %v177, %v225
  %v233 = vmul.f32 %v182, %v225
  %v234 = vmul.f32 %v185, %v225
  %v235 = vmul.f32 %v190, %v225
  %v236 = vmul.f32 %v193, %v225
  %v237 = vmul.f32 %v198, %v225
  %v238 = vmul.f32 %v201, %v225
  %v239 = vmul.f32 %v206, %v225
  %v240 = vmul.f32 %v209, %v225
  %v241 = vmul.f32 %v214, %v225
  %v242 = vmul.f32 %v217, %v225
  %v243 = vld [vmem:[%s3] sm:$0x1]
  %v245 = vlaneseq
  %v246 = vshrl.u32 %v245, 7
  %v247 = vsub.s32 0, %v246
  %v248 = vrot.slane %v243, %v247
  %v250 = vadd.f32 %v227, %v248
  %v251 = vadd.f32 %v228, %v248
  %v252 = vadd.f32 %v229, %v248
  %v253 = vadd.f32 %v230, %v248
  %v254 = vadd.f32 %v231, %v248
  %v255 = vadd.f32 %v232, %v248
  %v256 = vadd.f32 %v233, %v248
  %v257 = vadd.f32 %v234, %v248
  %v258 = vadd.f32 %v235, %v248
  %v259 = vadd.f32 %v236, %v248
  %v260 = vadd.f32 %v237, %v248
  %v261 = vadd.f32 %v238, %v248
  %v262 = vadd.f32 %v239, %v248
  %v263 = vadd.f32 %v240, %v248
  %v264 = vadd.f32 %v241, %v248
  %v265 = vadd.f32 %v242, %v248
  %v266 = vmul.f32 %v250, 0.5
  %v267 = vmul.f32 %v251, 0.5
  %v268 = vmul.f32 %v252, 0.5
  %v269 = vmul.f32 %v253, 0.5
  %v270 = vmul.f32 %v254, 0.5
  %v271 = vmul.f32 %v255, 0.5
  %v272 = vmul.f32 %v256, 0.5
  %v273 = vmul.f32 %v257, 0.5
  %v274 = vmul.f32 %v258, 0.5
  %v275 = vmul.f32 %v259, 0.5
  %v276 = vmul.f32 %v260, 0.5
  %v277 = vmul.f32 %v261, 0.5
  %v278 = vmul.f32 %v262, 0.5
  %v279 = vmul.f32 %v263, 0.5
  %v280 = vmul.f32 %v264, 0.5
  %v281 = vmul.f32 %v265, 0.5
  %v282 = vmul.f32 %v250, 0.044715
  %v283 = vmul.f32 %v251, 0.044715
  %v284 = vmul.f32 %v252, 0.044715
  %v285 = vmul.f32 %v253, 0.044715
  %v286 = vmul.f32 %v254, 0.044715
  %v287 = vmul.f32 %v255, 0.044715
  %v288 = vmul.f32 %v256, 0.044715
  %v289 = vmul.f32 %v257, 0.044715
  %v290 = vmul.f32 %v258, 0.044715
  %v291 = vmul.f32 %v259, 0.044715
  %v292 = vmul.f32 %v260, 0.044715
  %v293 = vmul.f32 %v261, 0.044715
  %v294 = vmul.f32 %v262, 0.044715
  %v295 = vmul.f32 %v263, 0.044715
  %v296 = vmul.f32 %v264, 0.044715
  %v297 = vmul.f32 %v265, 0.044715
  %v298 = vmul.f32 %v282, %v250
  %v299 = vmul.f32 %v283, %v251
  %v300 = vmul.f32 %v284, %v252
  %v301 = vmul.f32 %v285, %v253
  %v302 = vmul.f32 %v286, %v254
  %v303 = vmul.f32 %v287, %v255
  %v304 = vmul.f32 %v288, %v256
  %v305 = vmul.f32 %v289, %v257
  %v306 = vmul.f32 %v290, %v258
  %v307 = vmul.f32 %v291, %v259
  %v308 = vmul.f32 %v292, %v260
  %v309 = vmul.f32 %v293, %v261
  %v310 = vmul.f32 %v294, %v262
  %v311 = vmul.f32 %v295, %v263
  %v312 = vmul.f32 %v296, %v264
  %v313 = vmul.f32 %v297, %v265
  %v314 = vmul.f32 %v298, %v250
  %v315 = vmul.f32 %v299, %v251
  %v316 = vmul.f32 %v300, %v252
  %v317 = vmul.f32 %v301, %v253
  %v318 = vmul.f32 %v302, %v254
  %v319 = vmul.f32 %v303, %v255
  %v320 = vmul.f32 %v304, %v256
  %v321 = vmul.f32 %v305, %v257
  %v322 = vmul.f32 %v306, %v258
  %v323 = vmul.f32 %v307, %v259
  %v324 = vmul.f32 %v308, %v260
  %v325 = vmul.f32 %v309, %v261
  %v326 = vmul.f32 %v310, %v262
  %v327 = vmul.f32 %v311, %v263
  %v328 = vmul.f32 %v312, %v264
  %v329 = vmul.f32 %v313, %v265
  %v330 = vadd.f32 %v250, %v314
  %v331 = vadd.f32 %v251, %v315
  %v332 = vadd.f32 %v252, %v316
  %v333 = vadd.f32 %v253, %v317
  %v334 = vadd.f32 %v254, %v318
  %v335 = vadd.f32 %v255, %v319
  %v336 = vadd.f32 %v256, %v320
  %v337 = vadd.f32 %v257, %v321
  %v338 = vadd.f32 %v258, %v322
  %v339 = vadd.f32 %v259, %v323
  %v340 = vadd.f32 %v260, %v324
  %v341 = vadd.f32 %v261, %v325
  %v342 = vadd.f32 %v262, %v326
  %v343 = vadd.f32 %v263, %v327
  %v344 = vadd.f32 %v264, %v328
  %v345 = vadd.f32 %v265, %v329
  %v346 = vmul.f32 %v330, 0.7978846
  %v347 = vmul.f32 %v331, 0.7978846
  %v348 = vmul.f32 %v332, 0.7978846
  %v349 = vmul.f32 %v333, 0.7978846
  %v350 = vmul.f32 %v334, 0.7978846
  %v351 = vmul.f32 %v335, 0.7978846
  %v352 = vmul.f32 %v336, 0.7978846
  %v353 = vmul.f32 %v337, 0.7978846
  %v354 = vmul.f32 %v338, 0.7978846
  %v355 = vmul.f32 %v339, 0.7978846
  %v356 = vmul.f32 %v340, 0.7978846
  %v357 = vmul.f32 %v341, 0.7978846
  %v358 = vmul.f32 %v342, 0.7978846
  %v359 = vmul.f32 %v343, 0.7978846
  %v360 = vmul.f32 %v344, 0.7978846
  %v361 = vmul.f32 %v345, 0.7978846
  %v362 = vtanh.pop %v346
  %v363 = vtanh.pop %v347
  %v364 = vtanh.pop %v348
  %v365 = vtanh.pop %v349
  %v366 = vtanh.pop %v350
  %v367 = vtanh.pop %v351
  %v368 = vtanh.pop %v352
  %v369 = vtanh.pop %v353
  %v370 = vtanh.pop %v354
  %v371 = vtanh.pop %v355
  %v372 = vtanh.pop %v356
  %v373 = vtanh.pop %v357
  %v374 = vtanh.pop %v358
  %v375 = vtanh.pop %v359
  %v376 = vtanh.pop %v360
  %v377 = vtanh.pop %v361
  %v378 = vadd.f32 %v362, 1.0
  %v379 = vadd.f32 %v363, 1.0
  %v380 = vadd.f32 %v364, 1.0
  %v381 = vadd.f32 %v365, 1.0
  %v382 = vadd.f32 %v366, 1.0
  %v383 = vadd.f32 %v367, 1.0
  %v384 = vadd.f32 %v368, 1.0
  %v385 = vadd.f32 %v369, 1.0
  %v386 = vadd.f32 %v370, 1.0
  %v387 = vadd.f32 %v371, 1.0
  %v388 = vadd.f32 %v372, 1.0
  %v389 = vadd.f32 %v373, 1.0
  %v390 = vadd.f32 %v374, 1.0
  %v391 = vadd.f32 %v375, 1.0
  %v392 = vadd.f32 %v376, 1.0
  %v393 = vadd.f32 %v377, 1.0
  %v394 = vmul.f32 %v266, %v378
  %v395 = vmul.f32 %v267, %v379
  %v396 = vmul.f32 %v268, %v380
  %v397 = vmul.f32 %v269, %v381
  %v398 = vmul.f32 %v270, %v382
  %v399 = vmul.f32 %v271, %v383
  %v400 = vmul.f32 %v272, %v384
  %v401 = vmul.f32 %v273, %v385
  %v402 = vmul.f32 %v274, %v386
  %v403 = vmul.f32 %v275, %v387
  %v404 = vmul.f32 %v276, %v388
  %v405 = vmul.f32 %v277, %v389
  %v406 = vmul.f32 %v278, %v390
  %v407 = vmul.f32 %v279, %v391
  %v408 = vmul.f32 %v280, %v392
  %v409 = vmul.f32 %v281, %v393
  %410 = vst [vmem:[%s4] sm:$0xff] %v394
  %411 = vst [vmem:[%s4 + $0x8] sm:$0xff] %v395
  %412 = vst [vmem:[%s4 + $0x10] sm:$0xff] %v396
  %413 = vst [vmem:[%s4 + $0x18] sm:$0xff] %v397
  %414 = vst [vmem:[%s4 + $0x20] sm:$0xff] %v398
  %415 = vst [vmem:[%s4 + $0x28] sm:$0xff] %v399
  %416 = vst [vmem:[%s4 + $0x30] sm:$0xff] %v400
  %417 = vst [vmem:[%s4 + $0x38] sm:$0xff] %v401
  %418 = vst [vmem:[%s4 + $0x40] sm:$0xff] %v402
  %419 = vst [vmem:[%s4 + $0x48] sm:$0xff] %v403
  %420 = vst [vmem:[%s4 + $0x50] sm:$0xff] %v404
  %421 = vst [vmem:[%s4 + $0x58] sm:$0xff] %v405
  %422 = vst [vmem:[%s4 + $0x60] sm:$0xff] %v406
  %423 = vst [vmem:[%s4 + $0x68] sm:$0xff] %v407
  %424 = vst [vmem:[%s4 + $0x70] sm:$0xff] %v408
  %425 = vst [vmem:[%s4 + $0x78] sm:$0xff] %v409
  // Predicated region
  $region18: #{down_conv.3} parent=0 // pred_check
    _
  $region19: #{down_conv.3} parent=0 // pred_check_branch
    %427 = sbr.rel (0) target = $region21
  $region20: #{down_conv.3} parent=0 // pred_region
    _
  $region21: #{down_conv.3} parent=0 // pred_fallthru
    _
  // Predicated region
  $region22: #{down_conv.3} parent=0 // pred_check
    _
  $region23: #{down_conv.3} parent=0 // pred_check_branch
    %429 = sbr.rel (0) target = $region25
  $region24: #{down_conv.3} parent=0 // pred_region
    _
  $region25: #{down_conv.3} parent=0 // pred_fallthru
    _

</llo_original>
